<compile_context>
chip_gen: v7x
topology: tpu7x:2x2x1
jax: 0.10.0
libtpu: 0.0.40
codegen_flags: <defaults>
</compile_context>

<pallas_src>
import numpy as np
import jax
import jax.numpy as jnp
from jax.experimental import pallas as pl
from jax.experimental.pallas import tpu as pltpu


def _timestep_embedder_kernel(ts_ref, pe_ref, w1_ref, b1_ref, w2_ref, b2_ref,
                              out_ref):
    B = ts_ref.shape[0]
    max_len = pe_ref.shape[0]

    ts = ts_ref[...]                                       # (B, 1) int32
    # One-hot gather of pe[timesteps] on the MXU (zero per-row DMA traffic).
    iota = jax.lax.broadcasted_iota(jnp.int32, (B, max_len), 1)
    one_hot = (iota == ts).astype(jnp.float32)             # (B, max_len)
    x = jnp.dot(one_hot, pe_ref[...],
                preferred_element_type=jnp.float32)        # (B, D)

    # Batched MLP: (B,D)@(D,D) -> SiLU -> (B,D)@(D,D)
    h = jnp.dot(x, w1_ref[...],
                preferred_element_type=jnp.float32) + b1_ref[...]
    h = h * jax.nn.sigmoid(h)                              # SiLU
    y = jnp.dot(h, w2_ref[...],
                preferred_element_type=jnp.float32) + b2_ref[...]
    out_ref[...] = y.astype(out_ref.dtype)                 # one dense store


def timestep_embedder(timesteps, pe, w1, b1, w2, b2):
    """timesteps: (B,) int; pe: (max_len, 1, D); w*: (D, D); b*: (1, D)."""
    B = timesteps.shape[0]
    max_len, one, D = pe.shape
    assert one == 1

    ts2d = timesteps.astype(jnp.int32).reshape(B, 1)
    pe2d = pe.reshape(max_len, D)

    out = pl.pallas_call(
        _timestep_embedder_kernel,
        out_shape=jax.ShapeDtypeStruct((B, D), jnp.float32),
        grid=(1,),  # single invocation: whole batch + all operands fit in VMEM
        in_specs=[
            pl.BlockSpec((B, 1), lambda i: (0, 0)),         # timesteps
            pl.BlockSpec((max_len, D), lambda i: (0, 0)),   # pe table (resident)
            pl.BlockSpec((D, D), lambda i: (0, 0)),         # w1
            pl.BlockSpec((1, D), lambda i: (0, 0)),         # b1
            pl.BlockSpec((D, D), lambda i: (0, 0)),         # w2
            pl.BlockSpec((1, D), lambda i: (0, 0)),         # b2
        ],
        out_specs=pl.BlockSpec((B, D), lambda i: (0, 0)),
        compiler_params=pltpu.CompilerParams(
            dimension_semantics=("arbitrary",)),
    )(ts2d, pe2d, w1, b1, w2, b2)

    return out.reshape(B, 1, D)


def make_positional_encoding(max_len, d_model):
    """Standard sin/cos positional encoding, shape (max_len, 1, d_model)."""
    position = np.arange(max_len, dtype=np.float32)[:, None]
    div_term = np.exp(np.arange(0, d_model, 2, dtype=np.float32)
                      * (-np.log(10000.0) / d_model))
    pe = np.zeros((max_len, d_model), dtype=np.float32)
    pe[:, 0::2] = np.sin(position * div_term)
    pe[:, 1::2] = np.cos(position * div_term)
    return jnp.asarray(pe[:, None, :])


def reference_forward(timesteps, pe, w1, b1, w2, b2):
    x = pe[timesteps]                # (B, 1, D)
    h = x @ w1 + b1
    h = h * jax.nn.sigmoid(h)
    return h @ w2 + b2


if __name__ == "__main__":
    latent_dim = 32
    max_len = 64
    batch = 2

    key = jax.random.PRNGKey(0)
    k1, k2, k3, k4, kt = jax.random.split(key, 5)

    # Deterministic synthetic parameters (shapes per nn.Linear(D, D)).
    scale = 1.0 / np.sqrt(latent_dim)
    w1 = jax.random.uniform(k1, (latent_dim, latent_dim), jnp.float32,
                            -scale, scale)
    b1 = jax.random.uniform(k2, (1, latent_dim), jnp.float32, -scale, scale)
    w2 = jax.random.uniform(k3, (latent_dim, latent_dim), jnp.float32,
                            -scale, scale)
    b2 = jax.random.uniform(k4, (1, latent_dim), jnp.float32, -scale, scale)

    pe = make_positional_encoding(max_len, latent_dim)
    timesteps = jax.random.randint(kt, (batch,), 0, max_len, jnp.int32)

    out = timestep_embedder(timesteps, pe, w1, b1, w2, b2)
    out = jax.block_until_ready(out)

    ref = reference_forward(timesteps, pe, w1, b1, w2, b2)
    assert out.shape == (batch, 1, latent_dim)
    np.testing.assert_allclose(np.asarray(out), np.asarray(ref),
                               rtol=1e-5, atol=1e-5)
    print("KERNEL_OK")
</pallas_src>

<mosaic_0001>
module attributes {stable_mosaic.version = 11 : i64} {
  func.func @_timestep_embedder_kernel(%arg0: i32, %arg1: memref<2x1xi32, #tpu.memory_space<vmem>>, %arg2: memref<64x32xf32, #tpu.memory_space<vmem>>, %arg3: memref<32x32xf32, #tpu.memory_space<vmem>>, %arg4: memref<1x32xf32, #tpu.memory_space<vmem>>, %arg5: memref<32x32xf32, #tpu.memory_space<vmem>>, %arg6: memref<1x32xf32, #tpu.memory_space<vmem>>, %arg7: memref<2x32xf32, #tpu.memory_space<vmem>>) attributes {dimension_semantics = [#tpu.dimension_semantics<arbitrary>], iteration_bounds = array<i64: 1>, scalar_prefetch = 0 : i64, scratch_operands = 0 : i64, tpu.core_type = #tpu.core_type<tc>, window_params = [{pipeline_mode = #tpu.pipeline_mode<synchronous>, transform_indices = @transform_0, window_bounds = array<i64: 2, 1>}, {pipeline_mode = #tpu.pipeline_mode<synchronous>, transform_indices = @transform_1, window_bounds = array<i64: 64, 32>}, {pipeline_mode = #tpu.pipeline_mode<synchronous>, transform_indices = @transform_2, window_bounds = array<i64: 32, 32>}, {pipeline_mode = #tpu.pipeline_mode<synchronous>, transform_indices = @transform_3, window_bounds = array<i64: 1, 32>}, {pipeline_mode = #tpu.pipeline_mode<synchronous>, transform_indices = @transform_4, window_bounds = array<i64: 32, 32>}, {pipeline_mode = #tpu.pipeline_mode<synchronous>, transform_indices = @transform_5, window_bounds = array<i64: 1, 32>}, {pipeline_mode = #tpu.pipeline_mode<synchronous>, transform_indices = @transform_6, window_bounds = array<i64: 2, 32>}]} {
    %c0 = arith.constant 0 : index
    %c0_0 = arith.constant 0 : index
    %0 = vector.load %arg1[%c0, %c0_0] : memref<2x1xi32, #tpu.memory_space<vmem>>, vector<2x1xi32>
    %1 = tpu.iota {dimensions = array<i32: 1>} : vector<2x64xi32>
    %2 = vector.broadcast %0 : vector<2x1xi32> to vector<2x64xi32>
    %3 = arith.cmpi eq, %1, %2 : vector<2x64xi32>
    %4 = arith.extui %3 : vector<2x64xi1> to vector<2x64xi32>
    %5 = arith.sitofp %4 : vector<2x64xi32> to vector<2x64xf32>
    %c0_1 = arith.constant 0 : index
    %c0_2 = arith.constant 0 : index
    %6 = vector.load %arg2[%c0_1, %c0_2] : memref<64x32xf32, #tpu.memory_space<vmem>>, vector<64x32xf32>
    %cst = arith.constant dense<0.000000e+00> : vector<2x32xf32>
    %7 = tpu.matmul %5, %6, %cst {dimension_numbers = #tpu.dot_dimension_numbers<[1], [0], [0], [1], [0, 0, 1, 1], [], []>} : vector<2x64xf32>, vector<64x32xf32>, vector<2x32xf32> -> vector<2x32xf32>
    %c0_3 = arith.constant 0 : index
    %c0_4 = arith.constant 0 : index
    %8 = vector.load %arg3[%c0_3, %c0_4] : memref<32x32xf32, #tpu.memory_space<vmem>>, vector<32x32xf32>
    %cst_5 = arith.constant dense<0.000000e+00> : vector<2x32xf32>
    %9 = tpu.matmul %7, %8, %cst_5 {dimension_numbers = #tpu.dot_dimension_numbers<[1], [0], [0], [1], [0, 0, 1, 1], [], []>} : vector<2x32xf32>, vector<32x32xf32>, vector<2x32xf32> -> vector<2x32xf32>
    %c0_6 = arith.constant 0 : index
    %c0_7 = arith.constant 0 : index
    %10 = vector.load %arg4[%c0_6, %c0_7] : memref<1x32xf32, #tpu.memory_space<vmem>>, vector<1x32xf32>
    %11 = vector.broadcast %10 : vector<1x32xf32> to vector<2x32xf32>
    %12 = arith.addf %9, %11 : vector<2x32xf32>
    %13 = arith.negf %12 : vector<2x32xf32>
    %14 = math.exp %13 : vector<2x32xf32>
    %cst_8 = arith.constant 1.000000e+00 : f32
    %15 = vector.broadcast %cst_8 : f32 to vector<2x32xf32>
    %16 = arith.addf %15, %14 : vector<2x32xf32>
    %17 = arith.divf %15, %16 : vector<2x32xf32>
    %18 = arith.mulf %12, %17 : vector<2x32xf32>
    %c0_9 = arith.constant 0 : index
    %c0_10 = arith.constant 0 : index
    %19 = vector.load %arg5[%c0_9, %c0_10] : memref<32x32xf32, #tpu.memory_space<vmem>>, vector<32x32xf32>
    %cst_11 = arith.constant dense<0.000000e+00> : vector<2x32xf32>
    %20 = tpu.matmul %18, %19, %cst_11 {dimension_numbers = #tpu.dot_dimension_numbers<[1], [0], [0], [1], [0, 0, 1, 1], [], []>} : vector<2x32xf32>, vector<32x32xf32>, vector<2x32xf32> -> vector<2x32xf32>
    %c0_12 = arith.constant 0 : index
    %c0_13 = arith.constant 0 : index
    %21 = vector.load %arg6[%c0_12, %c0_13] : memref<1x32xf32, #tpu.memory_space<vmem>>, vector<1x32xf32>
    %22 = vector.broadcast %21 : vector<1x32xf32> to vector<2x32xf32>
    %23 = arith.addf %20, %22 : vector<2x32xf32>
    %c0_14 = arith.constant 0 : index
    %c0_15 = arith.constant 0 : index
    %24 = vector.load %arg7[%c0_14, %c0_15] : memref<2x32xf32, #tpu.memory_space<vmem>>, vector<2x32xf32>
    tpu.vector_store %arg7[%c0_14, %c0_15], %23 {strides = array<i32>} : memref<2x32xf32, #tpu.memory_space<vmem>>, vector<2x32xf32>,
    return
  }
  func.func @transform_0(%arg0: i32) -> (i32, i32) {
    %c0_i32 = arith.constant 0 : i32
    %c0_i32_0 = arith.constant 0 : i32
    %c0_i32_1 = arith.constant 0 : i32
    return %c0_i32, %c0_i32_0 : i32, i32
  }
  func.func @transform_1(%arg0: i32) -> (i32, i32) {
    %c0_i32 = arith.constant 0 : i32
    %c0_i32_0 = arith.constant 0 : i32
    %c0_i32_1 = arith.constant 0 : i32
    return %c0_i32, %c0_i32_0 : i32, i32
  }
  func.func @transform_2(%arg0: i32) -> (i32, i32) {
    %c0_i32 = arith.constant 0 : i32
    %c0_i32_0 = arith.constant 0 : i32
    %c0_i32_1 = arith.constant 0 : i32
    return %c0_i32, %c0_i32_0 : i32, i32
  }
  func.func @transform_3(%arg0: i32) -> (i32, i32) {
    %c0_i32 = arith.constant 0 : i32
    %c0_i32_0 = arith.constant 0 : i32
    %c0_i32_1 = arith.constant 0 : i32
    return %c0_i32, %c0_i32_0 : i32, i32
  }
  func.func @transform_4(%arg0: i32) -> (i32, i32) {
    %c0_i32 = arith.constant 0 : i32
    %c0_i32_0 = arith.constant 0 : i32
    %c0_i32_1 = arith.constant 0 : i32
    return %c0_i32, %c0_i32_0 : i32, i32
  }
  func.func @transform_5(%arg0: i32) -> (i32, i32) {
    %c0_i32 = arith.constant 0 : i32
    %c0_i32_0 = arith.constant 0 : i32
    %c0_i32_1 = arith.constant 0 : i32
    return %c0_i32, %c0_i32_0 : i32, i32
  }
  func.func @transform_6(%arg0: i32) -> (i32, i32) {
    %c0_i32 = arith.constant 0 : i32
    %c0_i32_0 = arith.constant 0 : i32
    %c0_i32_1 = arith.constant 0 : i32
    return %c0_i32, %c0_i32_0 : i32, i32
  }
}

</mosaic_0001>

<llo_original>
// kernel: tpu_custom_call.1
$region0: #{tpu_custom_call.1}
  #allocation0 [shape = 'u32[]', space=smem, size = 0x4, offset = 0x4, fixed_abs, tag = 'smem constant byte address 0x4 - core index']
  #allocation1 [shape = 'u32[144,128]{1,0:T(1,128)}', space=vmem, size = 0x12000, scoped, tag = 'internal scratch']
  %s0 = inlined_call_operand.vmem [shape: s32[2,1], index: 0, kind: input, shape index: {}]
  %s1 = inlined_call_operand.vmem [shape: f32[64,32], index: 1, kind: input, shape index: {}]
  %s2 = inlined_call_operand.vmem [shape: f32[32,32], index: 2, kind: input, shape index: {}]
  %s3 = inlined_call_operand.vmem [shape: f32[1,32], index: 3, kind: input, shape index: {}]
  %s4 = inlined_call_operand.vmem [shape: f32[32,32], index: 4, kind: input, shape index: {}]
  %s5 = inlined_call_operand.vmem [shape: f32[1,32], index: 5, kind: input, shape index: {}]
  %s6 = inlined_call_operand.hbm [shape: f32[2,32], index: 6, kind: output, shape index: {}]
  %s7 = sld [smem:[#allocation0]]
  $region34: #{tpu_custom_call.1} parent=0
    _
  %s9 = ssub.s32 1, %s7
  %s10 = scalar_select 0, %s9, %s7
  $region1: #{tpu_custom_call.1} parent=0
    #allocation2 [shape = 'u8[1024]{0}', space=vmem, size = 0x400, scoped, tag = 'output window, operand 0, single buffered']
    #allocation3 [shape = 's32[1]{0}', space=sflag, size = 0x4, scoped, tag = 'scoped memory for tpu_custom_call.1']
    %11 = vsyncpa [#allocation3], 0
    // Predicated region
    $region2: #{tpu_custom_call.1} parent=1 // pred_check
      _
    $region3: #{tpu_custom_call.1} parent=1 // pred_check_branch
      %13 = sbr.rel (0) target = $region5
    $region4: #{tpu_custom_call.1} parent=1 // pred_region
      _
    $region5: #{tpu_custom_call.1} parent=1 // pred_fallthru
      _
    // Predicated region
    $region6: #{tpu_custom_call.1} parent=1 // pred_check
      _
    $region7: #{tpu_custom_call.1} parent=1 // pred_check_branch
      %15 = sbr.rel (0) target = $region9
    $region8: #{tpu_custom_call.1} parent=1 // pred_region
      _
    $region9: #{tpu_custom_call.1} parent=1 // pred_fallthru
      _
    // Predicated region
    $region10: #{tpu_custom_call.1} parent=1 // pred_check
      _
    $region11: #{tpu_custom_call.1} parent=1 // pred_check_branch
      %17 = sbr.rel (0) target = $region13
    $region12: #{tpu_custom_call.1} parent=1 // pred_region
      _
    $region13: #{tpu_custom_call.1} parent=1 // pred_fallthru
      _
    // Predicated region
    $region14: #{tpu_custom_call.1} parent=1 // pred_check
      _
    $region15: #{tpu_custom_call.1} parent=1 // pred_check_branch
      %19 = sbr.rel (0) target = $region17
    $region16: #{tpu_custom_call.1} parent=1 // pred_region
      _
    $region17: #{tpu_custom_call.1} parent=1 // pred_fallthru
      _
    // Predicated region
    $region18: #{tpu_custom_call.1} parent=1 // pred_check
      _
    $region19: #{tpu_custom_call.1} parent=1 // pred_check_branch
      %21 = sbr.rel (0) target = $region21
    $region20: #{tpu_custom_call.1} parent=1 // pred_region
      _
    $region21: #{tpu_custom_call.1} parent=1 // pred_fallthru
      _
    // Predicated region
    $region22: #{tpu_custom_call.1} parent=1 // pred_check
      _
    $region23: #{tpu_custom_call.1} parent=1 // pred_check_branch
      %23 = sbr.rel (0) target = $region25
    $region24: #{tpu_custom_call.1} parent=1 // pred_region
      _
    $region25: #{tpu_custom_call.1} parent=1 // pred_fallthru
      _
    %v24 = vld [vmem:[%s0] sm:$0x3]
    %v25 = vlaneseq
    %v26 = vand.u32 %v25, 127
    %27 = vset.pattern.permute.xlu0 0
    %28 = vperm.xlu0 %27, %v24
    %v29 = vpop.permute.xlu0 %28
    %vm30 = vcmp.eq.s32.totalorder %v26, %v29
    %v31 = vsel %vm30, 1, 0
    %v32 = vcvt.s32.f32 %v31
    %v33 = vld [vmem:[%s1] sm:$0xff]
    %v34 = vld [vmem:[%s1 + $0x8] sm:$0xff]
    %v35 = vld [vmem:[%s1 + $0x10] sm:$0xff]
    %v36 = vld [vmem:[%s1 + $0x18] sm:$0xff]
    %v37 = vld [vmem:[%s1 + $0x20] sm:$0xff]
    %v38 = vld [vmem:[%s1 + $0x28] sm:$0xff]
    %v39 = vld [vmem:[%s1 + $0x30] sm:$0xff]
    %v40 = vld [vmem:[%s1 + $0x38] sm:$0xff]
    %vm41 = vcmask 523264
    %v43 = vsel %vm41, %v32, 0
    %45 = vmatprep.subr.mxu0 0.0
    %46 = vmatpush1.msra.mxu0 %v33
    %47 = vmatprep.subr.mxu0 0.0
    %48 = vmatpush1.msra.mxu0 %v34
    %49 = vmatprep.subr.mxu0 0.0
    %50 = vmatpush1.msra.mxu0 %v35
    %51 = vmatprep.subr.mxu0 0.0
    %52 = vmatpush1.msra.mxu0 %v36
    %53 = vmatprep.subr.mxu0 0.0
    %54 = vmatpush1.msra.mxu0 %v37
    %55 = vmatprep.subr.mxu0 0.0
    %56 = vmatpush1.msra.mxu0 %v38
    %57 = vmatprep.subr.mxu0 0.0
    %58 = vmatpush1.msra.mxu0 %v39
    %59 = vmatprep.subr.mxu0 0.0
    %60 = vmatpush1.msra.mxu0 %v40
    %61 = vmatprep.subr.mxu0 0.0
    %62 = vmatpush1.msra.mxu0 0.0
    %63 = vmatprep.subr.mxu0 0.0
    %64 = vmatpush1.msra.mxu0 0.0
    %65 = vmatprep.subr.mxu0 0.0
    %66 = vmatpush1.msra.mxu0 0.0
    %67 = vmatprep.subr.mxu0 0.0
    %68 = vmatpush1.msra.mxu0 0.0
    %69 = vmatprep.subr.mxu0 0.0
    %70 = vmatpush1.msra.mxu0 0.0
    %71 = vmatprep.subr.mxu0 0.0
    %72 = vmatpush1.msra.mxu0 0.0
    %73 = vmatprep.subr.mxu0 0.0
    %74 = vmatpush1.msra.mxu0 0.0
    %75 = vmatprep.subr.mxu0 0.0
    %76 = vmatpush1.msra.mxu0 0.0
    %77 = vmatprep.subr.mxu0 0.0
    %78 = vmatpush1.msra.mxu0 0.0
    %79 = vmatprep.subr.mxu0 0.0
    %80 = vmatpush1.msra.mxu0 0.0
    %81 = vmatprep.subr.mxu0 0.0
    %82 = vmatpush1.msra.mxu0 0.0
    %83 = vmatprep.subr.mxu0 0.0
    %84 = vmatpush1.msra.mxu0 0.0
    %85 = vmatprep.subr.mxu0 0.0
    %86 = vmatpush1.msra.mxu0 0.0
    %87 = vmatprep.subr.mxu0 0.0
    %88 = vmatpush1.msra.mxu0 0.0
    %89 = vmatprep.subr.mxu0 0.0
    %90 = vmatpush1.msra.mxu0 0.0
    %91 = vmatprep.subr.mxu0 0.0
    %92 = vmatpush1.msra.mxu0 0.0
    %93 = vmatprep.subr.mxu0 0.0
    %94 = vmatpush1.msra.mxu0 0.0
    %95 = vmatprep.subr.mxu0 0.0
    %96 = vmatpush1.msra.mxu0 0.0
    %97 = vmatprep.subr.mxu0 0.0
    %98 = vmatpush1.msra.mxu0 0.0
    %99 = vmatprep.subr.mxu0 0.0
    %100 = vmatpush1.msra.mxu0 0.0
    %101 = vmatprep.subr.mxu0 0.0
    %102 = vmatpush1.msra.mxu0 0.0
    %103 = vmatprep.subr.mxu0 0.0
    %104 = vmatpush1.msra.mxu0 0.0
    %105 = vmatprep.subr.mxu0 0.0
    %106 = vmatpush1.msra.mxu0 0.0
    %107 = vmatprep.subr.mxu0 0.0
    %108 = vmatpush1.msra.mxu0 0.0
    %109 = vmatprep.mubr.f32.mxu0 0.0
    %110 = vmatmul.mubr.f32.gmra.mrb[0].mxu0 %v43
    %v111 = vpop.f32.mrb[0].mxu0
    %v112 = vadd.f32 0.0, %v111
    %v113 = vpop.f32.mrb[0].mxu0
    %114 = vdwg.mxu0
    %v115 = vld [vmem:[%s2] sm:$0xff]
    %v116 = vld [vmem:[%s2 + $0x8] sm:$0xff]
    %v117 = vld [vmem:[%s2 + $0x10] sm:$0xff]
    %v118 = vld [vmem:[%s2 + $0x18] sm:$0xff]
    %v119 = vld [vmem:[%s3] sm:$0x1]
    %v121 = vlaneseq
    %v122 = vshrl.u32 %v121, 7
    %v123 = vsub.s32 0, %v122
    %v124 = vrot.slane %v119, %v123
    %vm126 = vcmask 261120
    %v128 = vsel %vm126, %v112, 0
    %130 = vmatprep.subr.mxu0 0.0
    %131 = vmatpush1.msra.mxu0 %v115
    %132 = vmatprep.subr.mxu0 0.0
    %133 = vmatpush1.msra.mxu0 %v116
    %134 = vmatprep.subr.mxu0 0.0
    %135 = vmatpush1.msra.mxu0 %v117
    %136 = vmatprep.subr.mxu0 0.0
    %137 = vmatpush1.msra.mxu0 %v118
    %138 = vmatprep.subr.mxu0 0.0
    %139 = vmatpush1.msra.mxu0 0.0
    %140 = vmatprep.subr.mxu0 0.0
    %141 = vmatpush1.msra.mxu0 0.0
    %142 = vmatprep.subr.mxu0 0.0
    %143 = vmatpush1.msra.mxu0 0.0
    %144 = vmatprep.subr.mxu0 0.0
    %145 = vmatpush1.msra.mxu0 0.0
    %146 = vmatprep.subr.mxu0 0.0
    %147 = vmatpush1.msra.mxu0 0.0
    %148 = vmatprep.subr.mxu0 0.0
    %149 = vmatpush1.msra.mxu0 0.0
    %150 = vmatprep.subr.mxu0 0.0
    %151 = vmatpush1.msra.mxu0 0.0
    %152 = vmatprep.subr.mxu0 0.0
    %153 = vmatpush1.msra.mxu0 0.0
    %154 = vmatprep.subr.mxu0 0.0
    %155 = vmatpush1.msra.mxu0 0.0
    %156 = vmatprep.subr.mxu0 0.0
    %157 = vmatpush1.msra.mxu0 0.0
    %158 = vmatprep.subr.mxu0 0.0
    %159 = vmatpush1.msra.mxu0 0.0
    %160 = vmatprep.subr.mxu0 0.0
    %161 = vmatpush1.msra.mxu0 0.0
    %162 = vmatprep.subr.mxu0 0.0
    %163 = vmatpush1.msra.mxu0 0.0
    %164 = vmatprep.subr.mxu0 0.0
    %165 = vmatpush1.msra.mxu0 0.0
    %166 = vmatprep.subr.mxu0 0.0
    %167 = vmatpush1.msra.mxu0 0.0
    %168 = vmatprep.subr.mxu0 0.0
    %169 = vmatpush1.msra.mxu0 0.0
    %170 = vmatprep.subr.mxu0 0.0
    %171 = vmatpush1.msra.mxu0 0.0
    %172 = vmatprep.subr.mxu0 0.0
    %173 = vmatpush1.msra.mxu0 0.0
    %174 = vmatprep.subr.mxu0 0.0
    %175 = vmatpush1.msra.mxu0 0.0
    %176 = vmatprep.subr.mxu0 0.0
    %177 = vmatpush1.msra.mxu0 0.0
    %178 = vmatprep.subr.mxu0 0.0
    %179 = vmatpush1.msra.mxu0 0.0
    %180 = vmatprep.subr.mxu0 0.0
    %181 = vmatpush1.msra.mxu0 0.0
    %182 = vmatprep.subr.mxu0 0.0
    %183 = vmatpush1.msra.mxu0 0.0
    %184 = vmatprep.subr.mxu0 0.0
    %185 = vmatpush1.msra.mxu0 0.0
    %186 = vmatprep.subr.mxu0 0.0
    %187 = vmatpush1.msra.mxu0 0.0
    %188 = vmatprep.subr.mxu0 0.0
    %189 = vmatpush1.msra.mxu0 0.0
    %190 = vmatprep.subr.mxu0 0.0
    %191 = vmatpush1.msra.mxu0 0.0
    %192 = vmatprep.subr.mxu0 0.0
    %193 = vmatpush1.msra.mxu0 0.0
    %194 = vmatprep.mubr.f32.mxu0 0.0
    %195 = vmatmul.mubr.f32.gmra.mrb[0].mxu0 %v128
    %v196 = vpop.f32.mrb[0].mxu0
    %v197 = vadd.f32 %v124, %v196
    %v198 = vpop.f32.mrb[0].mxu0
    %199 = vdwg.mxu0
    %v200 = vxor.u32 %v197, 2147483648
    %v201 = vmul.f32 %v200, 1.442695
    %v202 = vpow.pop %v201
    %v203 = vadd.f32 %v202, 1.0
    %v204 = vrcp.pop %v203
    %v205 = vmul.f32 1.0, %v204
    %v206 = vmul.f32 %v197, %v205
    %v207 = vld [vmem:[%s4] sm:$0xff]
    %v208 = vld [vmem:[%s4 + $0x8] sm:$0xff]
    %v209 = vld [vmem:[%s4 + $0x10] sm:$0xff]
    %v210 = vld [vmem:[%s4 + $0x18] sm:$0xff]
    %v211 = vld [vmem:[%s5] sm:$0x1]
    %v213 = vlaneseq
    %v214 = vshrl.u32 %v213, 7
    %v215 = vsub.s32 0, %v214
    %v216 = vrot.slane %v211, %v215
    %v219 = vsel %vm126, %v206, 0
    %221 = vmatprep.subr.mxu0 0.0
    %222 = vmatpush1.msra.mxu0 %v207
    %223 = vmatprep.subr.mxu0 0.0
    %224 = vmatpush1.msra.mxu0 %v208
    %225 = vmatprep.subr.mxu0 0.0
    %226 = vmatpush1.msra.mxu0 %v209
    %227 = vmatprep.subr.mxu0 0.0
    %228 = vmatpush1.msra.mxu0 %v210
    %229 = vmatprep.subr.mxu0 0.0
    %230 = vmatpush1.msra.mxu0 0.0
    %231 = vmatprep.subr.mxu0 0.0
    %232 = vmatpush1.msra.mxu0 0.0
    %233 = vmatprep.subr.mxu0 0.0
    %234 = vmatpush1.msra.mxu0 0.0
    %235 = vmatprep.subr.mxu0 0.0
    %236 = vmatpush1.msra.mxu0 0.0
    %237 = vmatprep.subr.mxu0 0.0
    %238 = vmatpush1.msra.mxu0 0.0
    %239 = vmatprep.subr.mxu0 0.0
    %240 = vmatpush1.msra.mxu0 0.0
    %241 = vmatprep.subr.mxu0 0.0
    %242 = vmatpush1.msra.mxu0 0.0
    %243 = vmatprep.subr.mxu0 0.0
    %244 = vmatpush1.msra.mxu0 0.0
    %245 = vmatprep.subr.mxu0 0.0
    %246 = vmatpush1.msra.mxu0 0.0
    %247 = vmatprep.subr.mxu0 0.0
    %248 = vmatpush1.msra.mxu0 0.0
    %249 = vmatprep.subr.mxu0 0.0
    %250 = vmatpush1.msra.mxu0 0.0
    %251 = vmatprep.subr.mxu0 0.0
    %252 = vmatpush1.msra.mxu0 0.0
    %253 = vmatprep.subr.mxu0 0.0
    %254 = vmatpush1.msra.mxu0 0.0
    %255 = vmatprep.subr.mxu0 0.0
    %256 = vmatpush1.msra.mxu0 0.0
    %257 = vmatprep.subr.mxu0 0.0
    %258 = vmatpush1.msra.mxu0 0.0
    %259 = vmatprep.subr.mxu0 0.0
    %260 = vmatpush1.msra.mxu0 0.0
    %261 = vmatprep.subr.mxu0 0.0
    %262 = vmatpush1.msra.mxu0 0.0
    %263 = vmatprep.subr.mxu0 0.0
    %264 = vmatpush1.msra.mxu0 0.0
    %265 = vmatprep.subr.mxu0 0.0
    %266 = vmatpush1.msra.mxu0 0.0
    %267 = vmatprep.subr.mxu0 0.0
    %268 = vmatpush1.msra.mxu0 0.0
    %269 = vmatprep.subr.mxu0 0.0
    %270 = vmatpush1.msra.mxu0 0.0
    %271 = vmatprep.subr.mxu0 0.0
    %272 = vmatpush1.msra.mxu0 0.0
    %273 = vmatprep.subr.mxu0 0.0
    %274 = vmatpush1.msra.mxu0 0.0
    %275 = vmatprep.subr.mxu0 0.0
    %276 = vmatpush1.msra.mxu0 0.0
    %277 = vmatprep.subr.mxu0 0.0
    %278 = vmatpush1.msra.mxu0 0.0
    %279 = vmatprep.subr.mxu0 0.0
    %280 = vmatpush1.msra.mxu0 0.0
    %281 = vmatprep.subr.mxu0 0.0
    %282 = vmatpush1.msra.mxu0 0.0
    %283 = vmatprep.subr.mxu0 0.0
    %284 = vmatpush1.msra.mxu0 0.0
    %285 = vmatprep.mubr.f32.mxu0 0.0
    %286 = vmatmul.mubr.f32.gmra.mrb[0].mxu0 %v219
    %v287 = vpop.f32.mrb[0].mxu0
    %v288 = vadd.f32 %v216, %v287
    %v289 = vpop.f32.mrb[0].mxu0
    %290 = vdwg.mxu0
    %vm291 = vcmask 254976
    %292 = vst.msk [vmem:[#allocation2] sm:$0x3] %vm291, %v288
    // Predicated region
    $region26: #{tpu_custom_call.1} parent=1 // pred_check
      _
    $region27: #{tpu_custom_call.1} parent=1 // pred_check_branch
      %294 = sbr.rel (0) target = $region29
    $region28: #{tpu_custom_call.1} parent=1 // pred_region
      %s296 = ssub.s32 32, 32
      %297 = vsyncadd [#allocation3], %s296
      %s299 = sshll.u32 [#allocation2], 4
      %s300 = int_to_ptr.vmem [resolvable:$true] %s299
      %302 = dma.vmem_to_hbm [thread:$0]  %s300, 32, %s6, [#allocation3]
    $region29: #{tpu_custom_call.1} parent=1 // pred_fallthru
      _
    // Predicated region
    $region30: #{tpu_custom_call.1} parent=1 // pred_check
      _
    $region31: #{tpu_custom_call.1} parent=1 // pred_check_branch
      %304 = sbr.rel (0) target = $region33
    $region32: #{tpu_custom_call.1} parent=1 // pred_region
      %305 = dma.done [#allocation3], 32
    $region33: #{tpu_custom_call.1} parent=1 // pred_fallthru
      _
    %306 = vsyncpa [#allocation3], 1

</llo_original>
